<compile_context>
chip_gen: v6e
topology: v6e:2x2x1
jax: 0.10.0
libtpu: 0.0.40
codegen_flags: <defaults>
</compile_context>

<pallas_src>
import functools

import jax
import jax.numpy as jnp
import numpy as np
from jax.experimental import pallas as pl
from jax.experimental.pallas import tpu as pltpu


# ---------------------------------------------------------------------------
# Kernels
# ---------------------------------------------------------------------------
def _rmse_nomask_kernel(x1_ref, x2_ref, num_ref, *, tile_c, l_total):
    """Accumulate per-sample sum((x1 - x2)^2) into num_ref of shape (tile_n, 1)."""
    j = pl.program_id(1)
    n_j = pl.num_programs(1)

    @pl.when(j == 0)
    def _():
        num_ref[...] = jnp.zeros_like(num_ref)

    d = x1_ref[...].astype(jnp.float32) - x2_ref[...].astype(jnp.float32)
    sq = d * d

    if l_total % tile_c != 0:
        # Only the last column step can read past L; gate the lane mask there
        # so the steady-state bundle carries no iota/compare/select.
        @pl.when(j == n_j - 1)
        def _():
            col = jax.lax.broadcasted_iota(jnp.int32, sq.shape, 1)
            valid = j * tile_c + col < l_total
            num_ref[...] += jnp.sum(jnp.where(valid, sq, 0.0), axis=1,
                                    keepdims=True)

        @pl.when(j != n_j - 1)
        def _():
            num_ref[...] += jnp.sum(sq, axis=1, keepdims=True)
    else:
        num_ref[...] += jnp.sum(sq, axis=1, keepdims=True)


def _rmse_masked_kernel(x1_ref, x2_ref, m_ref, num_ref, den_ref, *,
                        tile_c, l_total, binary_mask):
    """Accumulate per-sample sum(sq * mask) and sum(mask)."""
    j = pl.program_id(1)
    n_j = pl.num_programs(1)

    @pl.when(j == 0)
    def _():
        num_ref[...] = jnp.zeros_like(num_ref)
        den_ref[...] = jnp.zeros_like(den_ref)

    d = x1_ref[...].astype(jnp.float32) - x2_ref[...].astype(jnp.float32)
    sq = d * d
    if binary_mask:
        # bool masks arrive as int8: select instead of int8->f32 multiply.
        keep = m_ref[...] != 0
        num = jnp.where(keep, sq, 0.0)
        mf = keep.astype(jnp.float32)
    else:
        mf = m_ref[...].astype(jnp.float32)
        num = sq * mf

    def _accum(num_v, m_v):
        num_ref[...] += jnp.sum(num_v, axis=1, keepdims=True)
        den_ref[...] += jnp.sum(m_v, axis=1, keepdims=True)

    if l_total % tile_c != 0:
        @pl.when(j == n_j - 1)
        def _():
            col = jax.lax.broadcasted_iota(jnp.int32, num.shape, 1)
            valid = j * tile_c + col < l_total
            _accum(jnp.where(valid, num, 0.0), jnp.where(valid, mf, 0.0))

        @pl.when(j != n_j - 1)
        def _():
            _accum(num, mf)
    else:
        _accum(num, mf)


# ---------------------------------------------------------------------------
# Tiling heuristics
# ---------------------------------------------------------------------------
def _device_step_budget_bytes():
    """Per-grid-step streamed-input byte budget, tuned per TPU generation."""
    try:
        kind = jax.devices()[0].device_kind.lower()
    except Exception:
        return 8 << 20
    if "v7" in kind:
        return 16 << 20      # ~3.2 TB/s HBM: bigger steps amortize grid overhead
    if "v6" in kind:
        return 12 << 20
    return 8 << 20           # v5e & older / unknown


def _vmem_limit_bytes(budget):
    # Double-buffered input blocks (2 * budget) + headroom; stays well under
    # v7x's 64 MiB physical VMEM.
    return int(min(2 * budget + (16 << 20), 56 << 20))


def _pick_tiles(n, l, bytes_per_elem, budget):
    """(tile_n, tile_c): sample block (full N or a multiple of 8) and a
    lane-aligned column block sized so one step streams <= budget bytes."""
    l_pad = max(128, -(-l // 128) * 128)
    if n <= 8:
        tile_n = n
    else:
        fit = budget // max(1, l_pad * bytes_per_elem)   # full-row samples/step
        tile_n = min(n, max(8, (fit // 8) * 8))
        # Keep >= 2 blocks on the "parallel" sample axis when there is enough
        # work (two-TensorCore occupancy on v7x; harmless on v5e/v6e).
        if n >= 16:
            half = ((n // 2) // 8) * 8
            if half >= 8:
                tile_n = min(tile_n, half)
    max_elems = max(128, budget // max(1, tile_n * bytes_per_elem))
    tile_c = min((max_elems // 128) * 128, l_pad)
    tile_c = max(tile_c, 128)
    return tile_n, tile_c


# ---------------------------------------------------------------------------
# pallas_call wrappers
# ---------------------------------------------------------------------------
@functools.partial(jax.jit,
                   static_argnames=("tile_n", "tile_c", "vmem_limit"))
def _rmse_nomask_impl(x1, x2, *, tile_n, tile_c, vmem_limit):
    n, l = x1.shape
    grid = (pl.cdiv(n, tile_n), pl.cdiv(l, tile_c))
    kernel = functools.partial(_rmse_nomask_kernel, tile_c=tile_c, l_total=l)
    in_spec = pl.BlockSpec((tile_n, tile_c), lambda i, j: (i, j))
    out_spec = pl.BlockSpec((tile_n, 1), lambda i, j: (i, 0))
    ssum = pl.pallas_call(
        kernel,
        out_shape=jax.ShapeDtypeStruct((n, 1), jnp.float32),
        grid_spec=pltpu.PrefetchScalarGridSpec(
            num_scalar_prefetch=0,
            grid=grid,
            in_specs=[in_spec, in_spec],
            out_specs=out_spec,
        ),
        compiler_params=pltpu.CompilerParams(
            dimension_semantics=("parallel", "arbitrary"),
            vmem_limit_bytes=vmem_limit),
    )(x1, x2)
    return jnp.sqrt(jnp.mean(ssum[:, 0] / float(l)))


@functools.partial(jax.jit,
                   static_argnames=("tile_n", "tile_c", "vmem_limit",
                                    "binary_mask"))
def _rmse_masked_impl(x1, x2, m, *, tile_n, tile_c, vmem_limit, binary_mask):
    n, l = x1.shape
    grid = (pl.cdiv(n, tile_n), pl.cdiv(l, tile_c))
    kernel = functools.partial(_rmse_masked_kernel, tile_c=tile_c, l_total=l,
                               binary_mask=binary_mask)
    in_spec = pl.BlockSpec((tile_n, tile_c), lambda i, j: (i, j))
    out_spec = pl.BlockSpec((tile_n, 1), lambda i, j: (i, 0))
    num, den = pl.pallas_call(
        kernel,
        out_shape=(jax.ShapeDtypeStruct((n, 1), jnp.float32),
                   jax.ShapeDtypeStruct((n, 1), jnp.float32)),
        grid_spec=pltpu.PrefetchScalarGridSpec(
            num_scalar_prefetch=0,
            grid=grid,
            in_specs=[in_spec, in_spec, in_spec],
            out_specs=(out_spec, out_spec),
        ),
        compiler_params=pltpu.CompilerParams(
            dimension_semantics=("parallel", "arbitrary"),
            vmem_limit_bytes=vmem_limit),
    )(x1, x2, m)
    # den == 0 -> inf/nan, matching the PyTorch reference behavior.
    return jnp.sqrt(jnp.mean(num[:, 0] / den[:, 0]))


# ---------------------------------------------------------------------------
# Public API
# ---------------------------------------------------------------------------
def rmse(im1, im2, mask=None, step_bytes=None):
    """Root mean square error, matching the PyTorch RMSE module forward."""
    assert im1.shape == im2.shape, "input shape mismatch"
    n = im1.shape[0]
    l = int(np.prod(im1.shape[1:]))
    x1 = jnp.reshape(im1, (n, l))
    x2 = jnp.reshape(im2, (n, l))
    budget = int(step_bytes) if step_bytes is not None \
        else _device_step_budget_bytes()
    vmem_limit = _vmem_limit_bytes(budget)

    if mask is None:
        bpe = x1.dtype.itemsize + x2.dtype.itemsize
        tile_n, tile_c = _pick_tiles(n, l, bpe, budget)
        return _rmse_nomask_impl(x1, x2, tile_n=tile_n, tile_c=tile_c,
                                 vmem_limit=vmem_limit)

    assert mask.shape == im1.shape, "mask shape mismatch"
    binary = (mask.dtype == jnp.bool_)
    m = mask.astype(jnp.int8) if binary else mask   # bool streams at 1 B/elem
    m = jnp.reshape(m, (n, l))
    bpe = x1.dtype.itemsize + x2.dtype.itemsize + m.dtype.itemsize
    tile_n, tile_c = _pick_tiles(n, l, bpe, budget)
    return _rmse_masked_impl(x1, x2, m, tile_n=tile_n, tile_c=tile_c,
                             vmem_limit=vmem_limit, binary_mask=binary)


# ---------------------------------------------------------------------------
# Self-test
# ---------------------------------------------------------------------------
if __name__ == "__main__":
    key = jax.random.PRNGKey(0)
    k1, k2, k3, k4, k5, k6, k7 = jax.random.split(key, 7)

    def _np(x):
        return np.asarray(jax.device_get(x))

    # --- main NCHW case (L = C*H*W = 1024, a multiple of 128) --------------
    shape = (2, 4, 16, 16)
    im1 = jax.random.normal(k1, shape, dtype=jnp.float32)
    im2 = jax.random.normal(k2, shape, dtype=jnp.float32)
    maskf = (jax.random.uniform(k3, shape) > 0.5).astype(jnp.float32)
    maskb = maskf > 0.5

    out = jax.block_until_ready(rmse(im1, im2))
    ref = jnp.sqrt(jnp.mean((im1 - im2) ** 2))
    assert np.allclose(_np(out), _np(ref), rtol=1e-5, atol=1e-6)

    sq = (im1 - im2) ** 2
    ref_m = jnp.sqrt(jnp.mean((sq * maskf).reshape(2, -1).sum(-1)
                              / maskf.reshape(2, -1).sum(-1)))
    out_mf = jax.block_until_ready(rmse(im1, im2, maskf))       # float mask
    assert np.allclose(_np(out_mf), _np(ref_m), rtol=1e-5, atol=1e-6)
    out_mb = jax.block_until_ready(rmse(im1, im2, maskb))       # bool -> int8 path
    assert np.allclose(_np(out_mb), _np(ref_m), rtol=1e-5, atol=1e-6)

    # --- L not a multiple of 128 (no wrapper pad; in-kernel lane tail mask),
    #     tiny step budget forces multiple column steps + gated tail step ---
    shape2 = (2, 3, 7, 9)            # L = 189
    a = jax.random.normal(k4, shape2, dtype=jnp.float32)
    b = jax.random.normal(k5, shape2, dtype=jnp.float32)
    out2 = jax.block_until_ready(rmse(a, b, step_bytes=2048))
    ref2 = jnp.sqrt(jnp.mean((a - b) ** 2))
    assert np.allclose(_np(out2), _np(ref2), rtol=1e-5, atol=1e-6)

    m2 = (jax.random.uniform(k6, shape2) > 0.3).astype(jnp.float32)
    out2m = jax.block_until_ready(rmse(a, b, m2, step_bytes=2048))
    sq2 = (a - b) ** 2
    ref2m = jnp.sqrt(jnp.mean((sq2 * m2).reshape(2, -1).sum(-1)
                              / m2.reshape(2, -1).sum(-1)))
    assert np.allclose(_np(out2m), _np(ref2m), rtol=1e-5, atol=1e-6)

    # --- many samples: sample-block tiling with a ragged last row block ----
    shape3 = (20, 4, 16, 16)
    c = jax.random.normal(k7, shape3, dtype=jnp.float32)
    d = jax.random.normal(k1, shape3, dtype=jnp.float32)
    out3 = jax.block_until_ready(rmse(c, d))
    ref3 = jnp.sqrt(jnp.mean((c - d) ** 2))
    assert np.allclose(_np(out3), _np(ref3), rtol=1e-5, atol=1e-6)

    # --- bf16 inputs stream at native width (f32 math in-kernel) -----------
    im1b = im1.astype(jnp.bfloat16)
    im2b = im2.astype(jnp.bfloat16)
    outb = jax.block_until_ready(rmse(im1b, im2b))
    refb = jnp.sqrt(jnp.mean((im1b.astype(jnp.float32)
                              - im2b.astype(jnp.float32)) ** 2))
    assert np.allclose(_np(outb), _np(refb), rtol=1e-4, atol=1e-5)

    print("KERNEL_OK")
</pallas_src>

<mosaic_0001>
module attributes {stable_mosaic.version = 11 : i64} {
  func.func @_rmse_nomask_kernel(%arg0: i32, %arg1: i32, %arg2: memref<2x1024xf32, #tpu.memory_space<vmem>>, %arg3: memref<2x1024xf32, #tpu.memory_space<vmem>>, %arg4: memref<2x1xf32, #tpu.memory_space<vmem>>) attributes {dimension_semantics = [#tpu.dimension_semantics<parallel>, #tpu.dimension_semantics<arbitrary>], iteration_bounds = array<i64: 1, 1>, scalar_prefetch = 0 : i64, scratch_operands = 0 : i64, tpu.core_type = #tpu.core_type<tc>, window_params = [{transform_indices = @transform_0, window_bounds = array<i64: 2, 1024>}, {transform_indices = @transform_1, window_bounds = array<i64: 2, 1024>}, {transform_indices = @transform_2, window_bounds = array<i64: 2, 1>}]} {
    %c0_i32 = arith.constant 0 : i32
    %0 = arith.cmpi eq, %arg1, %c0_i32 : i32
    %1 = arith.extui %0 : i1 to i32
    %c0_i32_0 = arith.constant 0 : i32
    %2 = arith.cmpi ne, %1, %c0_i32_0 : i32
    scf.if %2 {
      %cst_8 = arith.constant 0.000000e+00 : f32
      %12 = vector.broadcast %cst_8 : f32 to vector<2x1xf32>
      %c0_9 = arith.constant 0 : index
      %c0_10 = arith.constant 0 : index
      %13 = vector.load %arg4[%c0_9, %c0_10] : memref<2x1xf32, #tpu.memory_space<vmem>>, vector<2x1xf32>
      tpu.vector_store %arg4[%c0_9, %c0_10], %12 {strides = array<i32>} : memref<2x1xf32, #tpu.memory_space<vmem>>, vector<2x1xf32>,
    } else {
    }
    %c0 = arith.constant 0 : index
    %c0_1 = arith.constant 0 : index
    %3 = vector.load %arg2[%c0, %c0_1] : memref<2x1024xf32, #tpu.memory_space<vmem>>, vector<2x1024xf32>
    %c0_2 = arith.constant 0 : index
    %c0_3 = arith.constant 0 : index
    %4 = vector.load %arg3[%c0_2, %c0_3] : memref<2x1024xf32, #tpu.memory_space<vmem>>, vector<2x1024xf32>
    %5 = arith.subf %3, %4 : vector<2x1024xf32>
    %6 = arith.mulf %5, %5 : vector<2x1024xf32>
    %c0_4 = arith.constant 0 : index
    %c0_5 = arith.constant 0 : index
    %7 = vector.load %arg4[%c0_4, %c0_5] : memref<2x1xf32, #tpu.memory_space<vmem>>, vector<2x1xf32>
    %cst = arith.constant dense<0.000000e+00> : vector<2xf32>
    %8 = vector.multi_reduction <add>, %6, %cst [1] : vector<2x1024xf32> to vector<2xf32>
    %9 = vector.shape_cast %8 : vector<2xf32> to vector<2x1xf32>
    %10 = arith.addf %7, %9 : vector<2x1xf32>
    %c0_6 = arith.constant 0 : index
    %c0_7 = arith.constant 0 : index
    %11 = vector.load %arg4[%c0_6, %c0_7] : memref<2x1xf32, #tpu.memory_space<vmem>>, vector<2x1xf32>
    tpu.vector_store %arg4[%c0_6, %c0_7], %10 {strides = array<i32>} : memref<2x1xf32, #tpu.memory_space<vmem>>, vector<2x1xf32>,
    return
  }
  func.func @transform_0(%arg0: i32, %arg1: i32) -> (i32, i32) {
    %c0_i32 = arith.constant 0 : i32
    return %arg0, %arg1 : i32, i32
  }
  func.func @transform_1(%arg0: i32, %arg1: i32) -> (i32, i32) {
    %c0_i32 = arith.constant 0 : i32
    return %arg0, %arg1 : i32, i32
  }
  func.func @transform_2(%arg0: i32, %arg1: i32) -> (i32, i32) {
    %c0_i32 = arith.constant 0 : i32
    %c0_i32_0 = arith.constant 0 : i32
    return %arg0, %c0_i32 : i32, i32
  }
}

</mosaic_0001>

<llo_original>
// kernel: _rmse_nomask_impl.1
$region0: #{_rmse_nomask_impl.1}
  #allocation0 [shape = 'u32[]', space=smem, size = 0x4, offset = 0x4, fixed_abs, tag = 'smem constant byte address 0x4 - core index']
  #allocation1 [shape = 'u32[144,128]{1,0:T(1,128)}', space=vmem, size = 0x12000, scoped, tag = 'internal scratch']
  %s0 = inlined_call_operand.hbm [shape: f32[2,1024], index: 0, kind: input, shape index: {}]
  %s1 = inlined_call_operand.hbm [shape: f32[2,1024], index: 1, kind: input, shape index: {}]
  %s2 = inlined_call_operand.vmem [shape: f32[2,1], index: 2, kind: output, shape index: {}]
  %s3 = sld [smem:[#allocation0]]
  $region30: #{_rmse_nomask_impl.1} parent=0
    _
  %s5 = ssub.s32 1, %s3
  %s6 = scalar_select 0, %s5, %s3
  $region1: #{_rmse_nomask_impl.1} parent=0
    #allocation2 [shape = 'u8[8192]{0}', space=vmem, size = 0x2000, scoped, tag = 'input window, operand 0, single buffered']
    #allocation3 [shape = 's32[1]{0}', space=sflag, size = 0x4, scoped, tag = 'scoped memory for _rmse_nomask_impl.1']
    #allocation4 [shape = 'u8[8192]{0}', space=vmem, size = 0x2000, scoped, tag = 'input window, operand 1, single buffered']
    #allocation5 [shape = 's32[1]{0}', space=sflag, size = 0x4, scoped, tag = 'scoped memory for _rmse_nomask_impl.1']
    %7 = vsyncpa [#allocation3], 0
    %8 = vsyncpa [#allocation5], 0
    // Predicated region
    $region2: #{_rmse_nomask_impl.1} parent=1 // pred_check
      _
    $region3: #{_rmse_nomask_impl.1} parent=1 // pred_check_branch
      %10 = sbr.rel (0) target = $region5
    $region4: #{_rmse_nomask_impl.1} parent=1 // pred_region
      %s12 = ssub.s32 256, 256
      %13 = vsyncadd [#allocation3], %s12
      %s15 = sshll.u32 [#allocation2], 4
      %s16 = int_to_ptr.vmem [resolvable:$true] %s15
      %18 = dma.hbm_to_vmem [thread:$0]  %s0, 256, %s16, [#allocation3]
    $region5: #{_rmse_nomask_impl.1} parent=1 // pred_fallthru
      _
    // Predicated region
    $region6: #{_rmse_nomask_impl.1} parent=1 // pred_check
      _
    $region7: #{_rmse_nomask_impl.1} parent=1 // pred_check_branch
      %20 = sbr.rel (0) target = $region9
    $region8: #{_rmse_nomask_impl.1} parent=1 // pred_region
      %s22 = ssub.s32 256, 256
      %23 = vsyncadd [#allocation5], %s22
      %s25 = sshll.u32 [#allocation4], 4
      %s26 = int_to_ptr.vmem [resolvable:$true] %s25
      %28 = dma.hbm_to_vmem [thread:$0]  %s1, 256, %s26, [#allocation5]
    $region9: #{_rmse_nomask_impl.1} parent=1 // pred_fallthru
      _
    // Predicated region
    $region10: #{_rmse_nomask_impl.1} parent=1 // pred_check
      _
    $region11: #{_rmse_nomask_impl.1} parent=1 // pred_check_branch
      %30 = sbr.rel (0) target = $region13
    $region12: #{_rmse_nomask_impl.1} parent=1 // pred_region
      %31 = dma.done [#allocation3], 256
    $region13: #{_rmse_nomask_impl.1} parent=1 // pred_fallthru
      _
    // Predicated region
    $region14: #{_rmse_nomask_impl.1} parent=1 // pred_check
      _
    $region15: #{_rmse_nomask_impl.1} parent=1 // pred_check_branch
      %33 = sbr.rel (0) target = $region17
    $region16: #{_rmse_nomask_impl.1} parent=1 // pred_region
      %34 = dma.done [#allocation5], 256
    $region17: #{_rmse_nomask_impl.1} parent=1 // pred_fallthru
      _
    %p35 = scmp.eq.s32.totalorder 0, 0
    // Predicated region
    $region18: #{_rmse_nomask_impl.1} parent=1 // pred_check
      %p36 = pneg %p35
    $region19: #{_rmse_nomask_impl.1} parent=1 // pred_check_branch
      %38 = sbr.rel (%p36) target = $region21
    $region20: #{_rmse_nomask_impl.1} parent=1 // pred_region
      %vm39 = vcmask 1024
      %40 = vst.msk [vmem:[%s2] sm:$0x3] %vm39, 0.0
    $region21: #{_rmse_nomask_impl.1} parent=1 // pred_fallthru
      _
    %v41 = vld [vmem:[#allocation2] sm:$0xff]
    %v42 = vld [vmem:[#allocation2 + $0x8] sm:$0xff]
    %v43 = vld [vmem:[#allocation4] sm:$0xff]
    %v44 = vld [vmem:[#allocation4 + $0x8] sm:$0xff]
    %v45 = vsub.f32 %v41, %v43
    %v46 = vsub.f32 %v42, %v44
    %v47 = vmul.f32 %v45, %v45
    %v48 = vmul.f32 %v46, %v46
    %v49 = vld [vmem:[%s2] sm:$0x3]
    %v52 = vcombine.high %v47, %v47
    %v54 = vunpack.c.l.s4 1983009808
    %v55 = vunpack.c.0.s8 %v54
    %v56 = vlaneseq
    %v57 = vshrl.u32 %v56, 7
    %v58 = vsub.s32 %v55, %v57
    %v59 = vrot.slane %v47, %v58
    %v61 = vunpack.c.l.s4 1983009808
    %v62 = vunpack.c.0.s8 %v61
    %v63 = vlaneseq
    %v64 = vshrl.u32 %v63, 7
    %v65 = vsub.s32 %v62, %v64
    %v66 = vrot.slane %v52, %v65
    %v67 = vcombine.high %v59, %v59
    %v68 = vcombine.high %v66, %v66
    %v69 = vcombine.high %v48, %v48
    %v71 = vunpack.c.l.s4 1983009808
    %v72 = vunpack.c.0.s8 %v71
    %v73 = vlaneseq
    %v74 = vshrl.u32 %v73, 7
    %v75 = vsub.s32 %v72, %v74
    %v76 = vrot.slane %v48, %v75
    %v78 = vunpack.c.l.s4 1983009808
    %v79 = vunpack.c.0.s8 %v78
    %v80 = vlaneseq
    %v81 = vshrl.u32 %v80, 7
    %v82 = vsub.s32 %v79, %v81
    %v83 = vrot.slane %v69, %v82
    %v84 = vcombine.high %v76, %v76
    %v85 = vcombine.high %v83, %v83
    %vm94 = vcmask 1041408
    %v95 = vsel %vm94, %v59, 0.0
    %v96 = vsel %vm94, %v67, 0.0
    %v97 = vadd.f32 %v95, %v96
    %v98 = vsel %vm94, %v66, 0.0
    %v99 = vadd.f32 %v97, %v98
    %v100 = vsel %vm94, %v68, 0.0
    %v101 = vadd.f32 %v99, %v100
    %v102 = vsel %vm94, %v76, 0.0
    %v103 = vadd.f32 %v101, %v102
    %v104 = vsel %vm94, %v84, 0.0
    %v105 = vadd.f32 %v103, %v104
    %v106 = vsel %vm94, %v83, 0.0
    %v107 = vadd.f32 %v105, %v106
    %v108 = vsel %vm94, %v85, 0.0
    %v109 = vadd.f32 %v107, %v108
    %110 = vadd.xlane.f32.xlu0 %v109
    %v111 = vpop.xlane.xlu0 %110
    %v112 = vadd.f32 %v49, %v111
    %vm113 = vcmask 1024
    %114 = vst.msk [vmem:[%s2] sm:$0x3] %vm113, %v112
    // Predicated region
    $region22: #{_rmse_nomask_impl.1} parent=1 // pred_check
      _
    $region23: #{_rmse_nomask_impl.1} parent=1 // pred_check_branch
      %116 = sbr.rel (0) target = $region25
    $region24: #{_rmse_nomask_impl.1} parent=1 // pred_region
      _
    $region25: #{_rmse_nomask_impl.1} parent=1 // pred_fallthru
      _
    // Predicated region
    $region26: #{_rmse_nomask_impl.1} parent=1 // pred_check
      _
    $region27: #{_rmse_nomask_impl.1} parent=1 // pred_check_branch
      %118 = sbr.rel (0) target = $region29
    $region28: #{_rmse_nomask_impl.1} parent=1 // pred_region
      _
    $region29: #{_rmse_nomask_impl.1} parent=1 // pred_fallthru
      _
    %119 = vsyncpa [#allocation3], 1
    %120 = vsyncpa [#allocation5], 1

</llo_original>
